<compile_context>
chip_gen: v6e
topology: v6e:2x2x1
jax: 0.10.0
libtpu: 0.0.40
codegen_flags: <defaults>
</compile_context>

<pallas_src>
import math

import jax
import jax.numpy as jnp
from jax.experimental import pallas as pl
from jax.experimental.pallas import tpu as pltpu


def _row_tile(n, per_row_bytes, target_bytes=2 << 20, vmem_budget=24 << 20):
    """Row tile for a 1-D grid over `n` batch rows.

    Returns a multiple of 8 that divides n (or n itself when n % 8 != 0, the
    only other legal block extent).  Sized so each grid step moves roughly
    `target_bytes` of HBM traffic while the double-buffered per-step footprint
    (~2 * tile * per_row_bytes) stays inside a v7x-safe VMEM budget; prefers
    keeping >= 2 grid steps so both v7x TensorCores get work."""
    if n % 8 != 0:
        return n                      # full-array block is the only legal tile
    cands = [t for t in range(8, n + 1, 8) if n % t == 0]
    tile = cands[0]
    for t in cands:
        if 2 * t * per_row_bytes > vmem_budget:
            break
        tile = t
        if t * per_row_bytes >= target_bytes:
            break
    if n // tile < 2:                 # keep both v7x TensorCores busy if we can
        smaller = [t for t in cands if n // t >= 2]
        if smaller:
            tile = smaller[-1]
    return tile


# ---------------------------------------------------------------------------
# Kernel 1: per-sentence linear scores for both heads (no bias).
# ---------------------------------------------------------------------------
def _proj_kernel(x_u_ref, x_s_ref, w_ref, pu_ref, ps_ref):
    """x_u_ref, x_s_ref : (TN, D) f32 tiles of the flattened (B*L, D) U and S.
       w_ref            : (D, 2) f32 stacked head weights [w_e | w_c].
       pu_ref, ps_ref   : (TN, 2) f32 scores <U, w_{e,c}>, <S, w_{e,c}>."""
    w = w_ref[...]
    pu_ref[...] = jnp.dot(x_u_ref[...], w, preferred_element_type=jnp.float32)
    ps_ref[...] = jnp.dot(x_s_ref[...], w, preferred_element_type=jnp.float32)


def _project(u2, s2, w):
    n, d = u2.shape
    # HBM traffic per flattened row: two d*4-byte reads (+ tiny 16 B write).
    tn = _row_tile(n, per_row_bytes=8 * d)
    x_spec = pl.BlockSpec((tn, d), lambda i: (i, 0))
    w_spec = pl.BlockSpec((d, 2), lambda i: (0, 0))
    o_spec = pl.BlockSpec((tn, 2), lambda i: (i, 0))
    return pl.pallas_call(
        _proj_kernel,
        out_shape=(jax.ShapeDtypeStruct((n, 2), jnp.float32),
                   jax.ShapeDtypeStruct((n, 2), jnp.float32)),
        grid_spec=pltpu.PrefetchScalarGridSpec(
            num_scalar_prefetch=0,
            grid=(n // tn,),
            in_specs=[x_spec, x_spec, w_spec],
            out_specs=[o_spec, o_spec],
        ),
        compiler_params=pltpu.CompilerParams(
            dimension_semantics=("parallel",)),
    )(u2, s2, w)


# ---------------------------------------------------------------------------
# Kernel 2: pairwise broadcast-add (UE / UC only; SE / SC are transposes).
# ---------------------------------------------------------------------------
def _pair_kernel(pse_ref, psc_ref, pue_ref, puc_ref, ue_ref, uc_ref):
    """pse_ref, psc_ref : (TI, 1, L) scores of this step's i-rows (S proj.).
       pue_ref, puc_ref : (1, B, L) scores of all j-rows (U proj., bias folded).
       ue_ref, uc_ref   : (TI, B, L) blocks: UE/UC[i, j, s] = head(S[i]+U[j])[s].
    Pure VPU broadcast adds: sublane broadcast of the i-operand over B, vreg
    reuse of the j-operand over TI; no lane concatenates."""
    ue_ref[...] = pse_ref[...] + pue_ref[...]
    uc_ref[...] = psc_ref[...] + puc_ref[...]


def _pairwise(ps_e, ps_c, pu_e, pu_c):
    b = ps_e.shape[0]
    l = ps_e.shape[2]
    # HBM traffic per i-row per step: 2 output tensors of b*l f32 rows.
    ti = _row_tile(b, per_row_bytes=2 * b * l * 4)
    i_spec = pl.BlockSpec((ti, 1, l), lambda i: (i, 0, 0))
    j_spec = pl.BlockSpec((1, b, l), lambda i: (0, 0, 0))
    o_spec = pl.BlockSpec((ti, b, l), lambda i: (i, 0, 0))
    return pl.pallas_call(
        _pair_kernel,
        out_shape=(jax.ShapeDtypeStruct((b, b, l), jnp.float32),
                   jax.ShapeDtypeStruct((b, b, l), jnp.float32)),
        grid_spec=pltpu.PrefetchScalarGridSpec(
            num_scalar_prefetch=0,
            grid=(b // ti,),
            in_specs=[i_spec, i_spec, j_spec, j_spec],
            out_specs=[o_spec, o_spec],
        ),
        compiler_params=pltpu.CompilerParams(
            dimension_semantics=("parallel",)),
    )(ps_e, ps_c, pu_e, pu_c)


@jax.jit
def diclass_forward(U, S, w_e, w_c, b_e, b_c):
    """UE/UC[i, j, s] = head_{e,c}(S[i] + U[j])[s].
    The other direction is the exact transpose: head(U[i] + S[j]) = UE/UC[j, i],
    so it is never recomputed or stored."""
    B, L, D = U.shape
    w = jnp.stack([w_e, w_c], axis=1).astype(jnp.float32)        # (D, 2)
    pu, ps = _project(U.reshape(B * L, D), S.reshape(B * L, D), w)
    # Tiny (B*L,)-sized glue between the two kernels: slice out the heads,
    # fold the biases into the U-side scores, and present broadcast-ready
    # layouts ((B,1,L) i-operand, (1,B,L) j-operand) — free row-major reshapes.
    pu_e = (pu[:, 0] + b_e).reshape(1, B, L)
    pu_c = (pu[:, 1] + b_c).reshape(1, B, L)
    ps_e = ps[:, 0].reshape(B, 1, L)
    ps_c = ps[:, 1].reshape(B, 1, L)
    return _pairwise(ps_e, ps_c, pu_e, pu_c)


class DiclassPallas:
    """JAX/Pallas port of Diclass (predU / classfication path only; RankNN is
    unavailable, see TODO above)."""

    def __init__(self, feat_dim, key):
        k1, k2, k3, k4 = jax.random.split(key, 4)
        bound = 1.0 / math.sqrt(feat_dim)          # PyTorch Linear default init
        self.w_e = jax.random.uniform(k1, (feat_dim,), jnp.float32, -bound, bound)
        self.w_c = jax.random.uniform(k2, (feat_dim,), jnp.float32, -bound, bound)
        self.b_e = jax.random.uniform(k3, (), jnp.float32, -bound, bound)
        self.b_c = jax.random.uniform(k4, (), jnp.float32, -bound, bound)

    def __call__(self, U, S):
        UE, UC = diclass_forward(U, S, self.w_e, self.w_c, self.b_e, self.b_c)
        B = U.shape[0]
        # Reference API returns per-i lists; all pairwise compute happened in
        # the single jitted dispatch above.  The second direction is served as
        # transposed views (SE[i] == UE[:, i]) instead of being recomputed and
        # re-stored, which halves the store-bound pair kernel's HBM writeback.
        list_UE = [UE[i] for i in range(B)]
        list_UC = [UC[i] for i in range(B)]
        list_SE = [UE[:, i] for i in range(B)]
        list_SC = [UC[:, i] for i in range(B)]
        list_UP, list_Upos, list_SP, list_Spos = [], [], [], []
        return (list_UE, list_UC, list_UP, list_Upos,
                list_SE, list_SC, list_SP, list_Spos)


def _reference(U, S, model):
    """Plain-JAX reference mirroring the PyTorch control flow."""
    B = U.shape[0]
    W = jnp.stack([model.w_e, model.w_c], axis=1)
    bias = jnp.stack([model.b_e, model.b_c])

    def pred(x):                                   # x: (B, L, D)
        out = x @ W + bias                         # (B, L, 2)
        return out[..., 0], out[..., 1]

    UE, UC, SE, SC = [], [], [], []
    for i in range(B):
        e, c = pred(S[i][None] + U)
        UE.append(e); UC.append(c)
    for i in range(B):
        e, c = pred(U[i][None] + S)
        SE.append(e); SC.append(c)
    return UE, UC, SE, SC


def _run_case(batch, seq, feat_dim, key):
    ku, ks, kp = jax.random.split(key, 3)
    U = jax.random.normal(ku, (batch, seq, feat_dim), dtype=jnp.float32)
    S = jax.random.normal(ks, (batch, seq, feat_dim), dtype=jnp.float32)

    model = DiclassPallas(feat_dim, kp)
    outs = model(U, S)
    outs = jax.tree_util.tree_map(jax.block_until_ready, outs)

    rUE, rUC, rSE, rSC = _reference(U, S, model)
    for got, want in zip(outs[0] + outs[1] + outs[4] + outs[5],
                         rUE + rUC + rSE + rSC):
        assert got.shape == want.shape, "shape mismatch vs reference"
        assert jnp.allclose(got, want, atol=1e-4, rtol=1e-4), \
            f"mismatch vs reference (B={batch}, L={seq}, D={feat_dim})"


if __name__ == "__main__":
    key = jax.random.PRNGKey(0)
    k1, k2 = jax.random.split(key)
    # Small module-consistent shapes; the second case exercises the tiled
    # (B % 8 == 0, B*L >= 128) code paths called out in the perf review.
    _run_case(batch=2, seq=8, feat_dim=32, key=k1)
    _run_case(batch=16, seq=8, feat_dim=32, key=k2)
    print("KERNEL_OK")
</pallas_src>

<mosaic_0001>
module attributes {stable_mosaic.version = 11 : i64} {
  func.func @_proj_kernel(%arg0: i32, %arg1: memref<8x32xf32, #tpu.memory_space<vmem>>, %arg2: memref<8x32xf32, #tpu.memory_space<vmem>>, %arg3: memref<32x2xf32, #tpu.memory_space<vmem>>, %arg4: memref<8x2xf32, #tpu.memory_space<vmem>>, %arg5: memref<8x2xf32, #tpu.memory_space<vmem>>) attributes {dimension_semantics = [#tpu.dimension_semantics<parallel>], iteration_bounds = array<i64: 2>, scalar_prefetch = 0 : i64, scratch_operands = 0 : i64, tpu.core_type = #tpu.core_type<tc>, window_params = [{transform_indices = @transform_0, window_bounds = array<i64: 8, 32>}, {transform_indices = @transform_1, window_bounds = array<i64: 8, 32>}, {pipeline_mode = #tpu.pipeline_mode<synchronous>, transform_indices = @transform_2, window_bounds = array<i64: 32, 2>}, {transform_indices = @transform_3, window_bounds = array<i64: 8, 2>}, {transform_indices = @transform_4, window_bounds = array<i64: 8, 2>}]} {
    %c0 = arith.constant 0 : index
    %c0_0 = arith.constant 0 : index
    %0 = vector.load %arg3[%c0, %c0_0] : memref<32x2xf32, #tpu.memory_space<vmem>>, vector<32x2xf32>
    %c0_1 = arith.constant 0 : index
    %c0_2 = arith.constant 0 : index
    %1 = vector.load %arg1[%c0_1, %c0_2] : memref<8x32xf32, #tpu.memory_space<vmem>>, vector<8x32xf32>
    %cst = arith.constant dense<0.000000e+00> : vector<8x2xf32>
    %2 = tpu.matmul %1, %0, %cst {dimension_numbers = #tpu.dot_dimension_numbers<[1], [0], [0], [1], [0, 0, 1, 1], [], []>} : vector<8x32xf32>, vector<32x2xf32>, vector<8x2xf32> -> vector<8x2xf32>
    %c0_3 = arith.constant 0 : index
    %c0_4 = arith.constant 0 : index
    %3 = vector.load %arg4[%c0_3, %c0_4] : memref<8x2xf32, #tpu.memory_space<vmem>>, vector<8x2xf32>
    tpu.vector_store %arg4[%c0_3, %c0_4], %2 {strides = array<i32>} : memref<8x2xf32, #tpu.memory_space<vmem>>, vector<8x2xf32>,
    %c0_5 = arith.constant 0 : index
    %c0_6 = arith.constant 0 : index
    %4 = vector.load %arg2[%c0_5, %c0_6] : memref<8x32xf32, #tpu.memory_space<vmem>>, vector<8x32xf32>
    %cst_7 = arith.constant dense<0.000000e+00> : vector<8x2xf32>
    %5 = tpu.matmul %4, %0, %cst_7 {dimension_numbers = #tpu.dot_dimension_numbers<[1], [0], [0], [1], [0, 0, 1, 1], [], []>} : vector<8x32xf32>, vector<32x2xf32>, vector<8x2xf32> -> vector<8x2xf32>
    %c0_8 = arith.constant 0 : index
    %c0_9 = arith.constant 0 : index
    %6 = vector.load %arg5[%c0_8, %c0_9] : memref<8x2xf32, #tpu.memory_space<vmem>>, vector<8x2xf32>
    tpu.vector_store %arg5[%c0_8, %c0_9], %5 {strides = array<i32>} : memref<8x2xf32, #tpu.memory_space<vmem>>, vector<8x2xf32>,
    return
  }
  func.func @transform_0(%arg0: i32) -> (i32, i32) {
    %c0_i32 = arith.constant 0 : i32
    %c0_i32_0 = arith.constant 0 : i32
    return %arg0, %c0_i32 : i32, i32
  }
  func.func @transform_1(%arg0: i32) -> (i32, i32) {
    %c0_i32 = arith.constant 0 : i32
    %c0_i32_0 = arith.constant 0 : i32
    return %arg0, %c0_i32 : i32, i32
  }
  func.func @transform_2(%arg0: i32) -> (i32, i32) {
    %c0_i32 = arith.constant 0 : i32
    %c0_i32_0 = arith.constant 0 : i32
    %c0_i32_1 = arith.constant 0 : i32
    return %c0_i32, %c0_i32_0 : i32, i32
  }
  func.func @transform_3(%arg0: i32) -> (i32, i32) {
    %c0_i32 = arith.constant 0 : i32
    %c0_i32_0 = arith.constant 0 : i32
    return %arg0, %c0_i32 : i32, i32
  }
  func.func @transform_4(%arg0: i32) -> (i32, i32) {
    %c0_i32 = arith.constant 0 : i32
    %c0_i32_0 = arith.constant 0 : i32
    return %arg0, %c0_i32 : i32, i32
  }
}

module attributes {stable_mosaic.version = 11 : i64} {
  func.func @_pair_kernel(%arg0: i32, %arg1: memref<2x1x8xf32, #tpu.memory_space<vmem>>, %arg2: memref<2x1x8xf32, #tpu.memory_space<vmem>>, %arg3: memref<1x2x8xf32, #tpu.memory_space<vmem>>, %arg4: memref<1x2x8xf32, #tpu.memory_space<vmem>>, %arg5: memref<2x2x8xf32, #tpu.memory_space<vmem>>, %arg6: memref<2x2x8xf32, #tpu.memory_space<vmem>>) attributes {dimension_semantics = [#tpu.dimension_semantics<parallel>], iteration_bounds = array<i64: 1>, scalar_prefetch = 0 : i64, scratch_operands = 0 : i64, tpu.core_type = #tpu.core_type<tc>, window_params = [{transform_indices = @transform_0, window_bounds = array<i64: 2, 1, 8>}, {transform_indices = @transform_1, window_bounds = array<i64: 2, 1, 8>}, {pipeline_mode = #tpu.pipeline_mode<synchronous>, transform_indices = @transform_2, window_bounds = array<i64: 1, 2, 8>}, {pipeline_mode = #tpu.pipeline_mode<synchronous>, transform_indices = @transform_3, window_bounds = array<i64: 1, 2, 8>}, {transform_indices = @transform_4, window_bounds = array<i64: 2, 2, 8>}, {transform_indices = @transform_5, window_bounds = array<i64: 2, 2, 8>}]} {
    %c0 = arith.constant 0 : index
    %c0_0 = arith.constant 0 : index
    %c0_1 = arith.constant 0 : index
    %0 = vector.load %arg1[%c0, %c0_0, %c0_1] : memref<2x1x8xf32, #tpu.memory_space<vmem>>, vector<2x1x8xf32>
    %c0_2 = arith.constant 0 : index
    %c0_3 = arith.constant 0 : index
    %c0_4 = arith.constant 0 : index
    %1 = vector.load %arg3[%c0_2, %c0_3, %c0_4] : memref<1x2x8xf32, #tpu.memory_space<vmem>>, vector<1x2x8xf32>
    %2 = vector.broadcast %0 : vector<2x1x8xf32> to vector<2x2x8xf32>
    %3 = vector.broadcast %1 : vector<1x2x8xf32> to vector<2x2x8xf32>
    %4 = arith.addf %2, %3 : vector<2x2x8xf32>
    %c0_5 = arith.constant 0 : index
    %c0_6 = arith.constant 0 : index
    %c0_7 = arith.constant 0 : index
    %5 = vector.load %arg5[%c0_5, %c0_6, %c0_7] : memref<2x2x8xf32, #tpu.memory_space<vmem>>, vector<2x2x8xf32>
    tpu.vector_store %arg5[%c0_5, %c0_6, %c0_7], %4 {strides = array<i32>} : memref<2x2x8xf32, #tpu.memory_space<vmem>>, vector<2x2x8xf32>,
    %c0_8 = arith.constant 0 : index
    %c0_9 = arith.constant 0 : index
    %c0_10 = arith.constant 0 : index
    %6 = vector.load %arg2[%c0_8, %c0_9, %c0_10] : memref<2x1x8xf32, #tpu.memory_space<vmem>>, vector<2x1x8xf32>
    %c0_11 = arith.constant 0 : index
    %c0_12 = arith.constant 0 : index
    %c0_13 = arith.constant 0 : index
    %7 = vector.load %arg4[%c0_11, %c0_12, %c0_13] : memref<1x2x8xf32, #tpu.memory_space<vmem>>, vector<1x2x8xf32>
    %8 = vector.broadcast %6 : vector<2x1x8xf32> to vector<2x2x8xf32>
    %9 = vector.broadcast %7 : vector<1x2x8xf32> to vector<2x2x8xf32>
    %10 = arith.addf %8, %9 : vector<2x2x8xf32>
    %c0_14 = arith.constant 0 : index
    %c0_15 = arith.constant 0 : index
    %c0_16 = arith.constant 0 : index
    %11 = vector.load %arg6[%c0_14, %c0_15, %c0_16] : memref<2x2x8xf32, #tpu.memory_space<vmem>>, vector<2x2x8xf32>
    tpu.vector_store %arg6[%c0_14, %c0_15, %c0_16], %10 {strides = array<i32>} : memref<2x2x8xf32, #tpu.memory_space<vmem>>, vector<2x2x8xf32>,
    return
  }
  func.func @transform_0(%arg0: i32) -> (i32, i32, i32) {
    %c0_i32 = arith.constant 0 : i32
    %c0_i32_0 = arith.constant 0 : i32
    %c0_i32_1 = arith.constant 0 : i32
    return %arg0, %c0_i32, %c0_i32_0 : i32, i32, i32
  }
  func.func @transform_1(%arg0: i32) -> (i32, i32, i32) {
    %c0_i32 = arith.constant 0 : i32
    %c0_i32_0 = arith.constant 0 : i32
    %c0_i32_1 = arith.constant 0 : i32
    return %arg0, %c0_i32, %c0_i32_0 : i32, i32, i32
  }
  func.func @transform_2(%arg0: i32) -> (i32, i32, i32) {
    %c0_i32 = arith.constant 0 : i32
    %c0_i32_0 = arith.constant 0 : i32
    %c0_i32_1 = arith.constant 0 : i32
    %c0_i32_2 = arith.constant 0 : i32
    return %c0_i32, %c0_i32_0, %c0_i32_1 : i32, i32, i32
  }
  func.func @transform_3(%arg0: i32) -> (i32, i32, i32) {
    %c0_i32 = arith.constant 0 : i32
    %c0_i32_0 = arith.constant 0 : i32
    %c0_i32_1 = arith.constant 0 : i32
    %c0_i32_2 = arith.constant 0 : i32
    return %c0_i32, %c0_i32_0, %c0_i32_1 : i32, i32, i32
  }
  func.func @transform_4(%arg0: i32) -> (i32, i32, i32) {
    %c0_i32 = arith.constant 0 : i32
    %c0_i32_0 = arith.constant 0 : i32
    %c0_i32_1 = arith.constant 0 : i32
    return %arg0, %c0_i32, %c0_i32_0 : i32, i32, i32
  }
  func.func @transform_5(%arg0: i32) -> (i32, i32, i32) {
    %c0_i32 = arith.constant 0 : i32
    %c0_i32_0 = arith.constant 0 : i32
    %c0_i32_1 = arith.constant 0 : i32
    return %arg0, %c0_i32, %c0_i32_0 : i32, i32, i32
  }
}

</mosaic_0001>

<llo_original>
// kernel: squeeze.6
$region0: #{squeeze.6}
  %s0 = inlined_call_operand.vmem [shape: f32[16], index: 0, kind: input, shape index: {}]
  %s1 = inlined_call_operand.vmem [shape: f32[2,1,8], index: 1, kind: output, shape index: {}]
  $region1: #{squeeze.6} parent=0
    #allocation0 [shape = 'u8[4096]{0}', space=vmem, size = 0x1000, scoped, tag = 'scoped mem for output reshape']
    #allocation1 [shape = 'u8[4096]{0}', space=vmem, size = 0x1000, scoped, tag = 'scoped mem for input reshape']
    %s3 = sshll.u32 1, 1
    %s4 = ssub.s32 %s3, 1
    %v5 = vld [vmem:[%s0] sm:%s4]
    %6 = vst [vmem:[#allocation1] sm:%s4] %v5
    %v7 = vld [vmem:[#allocation1] sm:$0x1]
    %vm8 = vcmask 64512
    %9 = vst.msk [vmem:[#allocation0] sm:$0x1] %vm8, %v7
    %v10 = vld [vmem:[#allocation1] sm:$0x1]
    %11 = vrot.lane.b32.xlu0 %v10, 120
    %v12 = vpop.permute.xlu0 %11
    %vm13 = vcmask 64512
    %s14 = scalar_lea.vmem [#allocation0], 1
    %15 = vst.msk [vmem:[%s14] sm:$0x1] %vm13, %v12
    %s17 = sshll.u32 1, 2
    %s18 = ssub.s32 %s17, 1
    %v20 = vld [vmem:[#allocation0] sm:%s18]
    %s21 = sshll.u32 1, 2
    %s22 = ssub.s32 %s21, 1
    %23 = vst [vmem:[%s1] sm:%s22] %v20

// kernel: diclass_forward.2
$region0: #{diclass_forward.2}
  #allocation0 [shape = 'u32[]', space=smem, size = 0x4, offset = 0x4, fixed_abs, tag = 'smem constant byte address 0x4 - core index']
  #allocation1 [shape = 'u32[144,128]{1,0:T(1,128)}', space=vmem, size = 0x12000, scoped, tag = 'internal scratch']
  %s0 = inlined_call_operand.vmem [shape: f32[16,32], index: 0, kind: input, shape index: {}]
  %s1 = inlined_call_operand.vmem [shape: f32[16,32], index: 1, kind: input, shape index: {}]
  %s2 = inlined_call_operand.vmem [shape: f32[32,2], index: 2, kind: input, shape index: {}]
  %s3 = inlined_call_operand.vmem [shape: f32[16,2], index: 3, kind: output, shape index: {0}]
  %s4 = inlined_call_operand.vmem [shape: f32[16,2], index: 4, kind: output, shape index: {1}]
  %5 = xla_tuple %s3, %s4
  %s6 = sld [smem:[#allocation0]]
  $region53: #{diclass_forward.2} parent=0
    _
  %s8 = ssub.s32 1, %s6
  %s9 = scalar_select 0, %s8, %s6
  loop: start=0, step=1, limit=4
  $region2: #{diclass_forward.2} parent=0 // loop_pre_header
    _
  $region3: #{diclass_forward.2} parent=0 // loop_header
    %s11 = sphi 0, %s15
    %p12 = scmp.ge.s32.totalorder %s11, 4
    %s21 = sphi 0, %s23
    %s24 = sphi 0, %s21
    %s25 = sphi 0, %s24
    %s41 = sphi 0, %s25
    %s47 = sphi 0, %s49
    %s50 = sphi 0, %s47
    %s51 = sphi 0, %s50
    %s67 = sphi 0, %s51
    %s71 = sphi 0, %s71
    %s73 = sphi 0, %s71
    %s74 = sphi 0, %s73
    %s88 = sphi 0, %s74
    %s94 = sphi 0, %s96
    %s97 = sphi 0, %s94
    %s98 = sphi 0, %s97
    %s114 = sphi 0, %s98
    %s120 = sphi 0, %s122
    %s123 = sphi 0, %s120
    %s124 = sphi 0, %s123
    %s140 = sphi 0, %s124
  $region4: #{diclass_forward.2} parent=0 // loop_header_branch
    %14 = sbr.rel (%p12) target = $region8
  $region5: #{diclass_forward.2} parent=0 // loop_body
    %s16 = ssub.s32 %s11, 1
    %s17 = ssub.s32 %s11, 2
    %s18 = sadd.s32 %s11, 1
    %s19 = ssub.s32 %s11, %s18
    %p20 = scmp.eq.s32.totalorder %s19, 0
    %s22 = sadd.s32 %s21, 1
    %s23 = scalar_select %p20, %s21, %s22
    %p26 = pneg %p20
    %p27 = scmp.eq.s32.totalorder %s11, 1
    %p28 = por %p26, %p27
    %p29 = scmp.ne.s32.totalorder %s21, %s24
    %p30 = scmp.eq.s32.totalorder %s11, 0
    %p31 = por %p29, %p30
    %p32 = scmp.ne.s32.totalorder %s21, %s24
    %p33 = scmp.eq.s32.totalorder %s16, 1
    %p34 = por %p32, %p33
    %p35 = scmp.ne.s32.totalorder %s24, %s25
    %p36 = scmp.eq.s32.totalorder %s16, 0
    %p37 = por %p35, %p36
    %p38 = scmp.ne.s32.totalorder %s24, %s25
    %p39 = scmp.eq.s32.totalorder %s17, 1
    %p40 = por %p38, %p39
    %p42 = scmp.ne.s32.totalorder %s25, %s41
    %p43 = scmp.eq.s32.totalorder %s17, 0
    %p44 = por %p42, %p43
    %s45 = ssub.s32 %s11, %s18
    %p46 = scmp.eq.s32.totalorder %s45, 0
    %s48 = sadd.s32 %s47, 1
    %s49 = scalar_select %p46, %s47, %s48
    %p52 = pneg %p46
    %p53 = scmp.eq.s32.totalorder %s11, 1
    %p54 = por %p52, %p53
    %p55 = scmp.ne.s32.totalorder %s47, %s50
    %p56 = scmp.eq.s32.totalorder %s11, 0
    %p57 = por %p55, %p56
    %p58 = scmp.ne.s32.totalorder %s47, %s50
    %p59 = scmp.eq.s32.totalorder %s16, 1
    %p60 = por %p58, %p59
    %p61 = scmp.ne.s32.totalorder %s50, %s51
    %p62 = scmp.eq.s32.totalorder %s16, 0
    %p63 = por %p61, %p62
    %p64 = scmp.ne.s32.totalorder %s50, %s51
    %p65 = scmp.eq.s32.totalorder %s17, 1
    %p66 = por %p64, %p65
    %p68 = scmp.ne.s32.totalorder %s51, %s67
    %p69 = scmp.eq.s32.totalorder %s17, 0
    %p70 = por %p68, %p69
    %s72 = sadd.s32 %s71, 1
    %p75 = scmp.eq.s32.totalorder %s11, 1
    %p76 = scmp.ne.s32.totalorder %s71, %s73
    %p77 = scmp.eq.s32.totalorder %s11, 0
    %p78 = por %p76, %p77
    %p79 = scmp.ne.s32.totalorder %s71, %s73
    %p80 = scmp.eq.s32.totalorder %s16, 1
    %p81 = por %p79, %p80
    %p82 = scmp.ne.s32.totalorder %s73, %s74
    %p83 = scmp.eq.s32.totalorder %s16, 0
    %p84 = por %p82, %p83
    %p85 = scmp.ne.s32.totalorder %s73, %s74
    %p86 = scmp.eq.s32.totalorder %s17, 1
    %p87 = por %p85, %p86
    %p89 = scmp.ne.s32.totalorder %s74, %s88
    %p90 = scmp.eq.s32.totalorder %s17, 0
    %p91 = por %p89, %p90
    %s92 = ssub.s32 %s11, %s18
    %p93 = scmp.eq.s32.totalorder %s92, 0
    %s95 = sadd.s32 %s94, 1
    %s96 = scalar_select %p93, %s94, %s95
    %p99 = pneg %p93
    %p100 = scmp.eq.s32.totalorder %s11, 1
    %p101 = por %p99, %p100
    %p102 = scmp.ne.s32.totalorder %s94, %s97
    %p103 = scmp.eq.s32.totalorder %s11, 0
    %p104 = por %p102, %p103
    %p105 = scmp.ne.s32.totalorder %s94, %s97
    %p106 = scmp.eq.s32.totalorder %s16, 1
    %p107 = por %p105, %p106
    %p108 = scmp.ne.s32.totalorder %s97, %s98
    %p109 = scmp.eq.s32.totalorder %s16, 0
    %p110 = por %p108, %p109
    %p111 = scmp.ne.s32.totalorder %s97, %s98
    %p112 = scmp.eq.s32.totalorder %s17, 1
    %p113 = por %p111, %p112
    %p115 = scmp.ne.s32.totalorder %s98, %s114
    %p116 = scmp.eq.s32.totalorder %s17, 0
    %p117 = por %p115, %p116
    %s118 = ssub.s32 %s11, %s18
    %p119 = scmp.eq.s32.totalorder %s118, 0
    %s121 = sadd.s32 %s120, 1
    %s122 = scalar_select %p119, %s120, %s121
    %p125 = pneg %p119
    %p126 = scmp.eq.s32.totalorder %s11, 1
    %p127 = por %p125, %p126
    %p128 = scmp.ne.s32.totalorder %s120, %s123
    %p129 = scmp.eq.s32.totalorder %s11, 0
    %p130 = por %p128, %p129
    %p131 = scmp.ne.s32.totalorder %s120, %s123
    %p132 = scmp.eq.s32.totalorder %s16, 1
    %p133 = por %p131, %p132
    %p134 = scmp.ne.s32.totalorder %s123, %s124
    %p135 = scmp.eq.s32.totalorder %s16, 0
    %p136 = por %p134, %p135
    %p137 = scmp.ne.s32.totalorder %s123, %s124
    %p138 = scmp.eq.s32.totalorder %s17, 1
    %p139 = por %p137, %p138
    %p141 = scmp.ne.s32.totalorder %s124, %s140
    %p142 = scmp.eq.s32.totalorder %s17, 0
    %p143 = por %p141, %p142
    %p144 = scmp.le.s32.totalorder 1, %s11
    %p145 = scmp.lt.s32.totalorder %s11, 3
    %p146 = pnand %p144, %p145
    %p147 = pneg %p146
    // Predicated region
    $region9: #{diclass_forward.2} parent=5 // pred_check
      _
    $region10: #{diclass_forward.2} parent=5 // pred_check_branch
      %149 = sbr.rel (%p146) target = $region12
    $region11: #{diclass_forward.2} parent=5 // pred_region
      %s150 = ssub.s32 %s11, 1
      // Predicated region
      $region13: #{diclass_forward.2} parent=11 // pred_check
        %p151 = pneg %p84
      $region14: #{diclass_forward.2} parent=11 // pred_check_branch
        %153 = sbr.rel (%p151) target = $region16
      $region15: #{diclass_forward.2} parent=11 // pred_region
        _
      $region16: #{diclass_forward.2} parent=11 // pred_fallthru
        _
    $region12: #{diclass_forward.2} parent=5 // pred_fallthru
      _
    %p154 = scmp.lt.s32.totalorder %s11, 2
    // Predicated region
    $region17: #{diclass_forward.2} parent=5 // pred_check
      %p155 = pneg %p154
    $region18: #{diclass_forward.2} parent=5 // pred_check_branch
      %157 = sbr.rel (%p155) target = $region20
    $region19: #{diclass_forward.2} parent=5 // pred_region
      // Predicated region
      $region21: #{diclass_forward.2} parent=19 // pred_check
        %p158 = pneg %p31
      $region22: #{diclass_forward.2} parent=19 // pred_check_branch
        %160 = sbr.rel (%p158) target = $region24
      $region23: #{diclass_forward.2} parent=19 // pred_region
        %p161 = scmp.lt.s32.totalorder %s11, 1
        %s162 = scalar_select %p161, %s11, 1
        %s163 = smul.addr %s162, 8
        %s164 = scalar_lea.vmem %s0, %s163
      $region24: #{diclass_forward.2} parent=19 // pred_fallthru
        _
      // Predicated region
      $region25: #{diclass_forward.2} parent=19 // pred_check
        %p165 = pneg %p57
      $region26: #{diclass_forward.2} parent=19 // pred_check_branch
        %167 = sbr.rel (%p165) target = $region28
      $region27: #{diclass_forward.2} parent=19 // pred_region
        %p168 = scmp.lt.s32.totalorder %s11, 1
        %s169 = scalar_select %p168, %s11, 1
        %s170 = smul.addr %s169, 8
        %s171 = scalar_lea.vmem %s1, %s170
      $region28: #{diclass_forward.2} parent=19 // pred_fallthru
        _
    $region20: #{diclass_forward.2} parent=5 // pred_fallthru
      _
    %p172 = scmp.le.s32.totalorder 1, %s11
    %p173 = scmp.lt.s32.totalorder %s11, 3
    %p174 = pnand %p172, %p173
    %p175 = pneg %p174
    // Predicated region
    $region29: #{diclass_forward.2} parent=5 // pred_check
      _
    $region30: #{diclass_forward.2} parent=5 // pred_check_branch
      %177 = sbr.rel (%p174) target = $region32
    $region31: #{diclass_forward.2} parent=5 // pred_region
      %s178 = ssub.s32 %s11, 1
      %p179 = scmp.lt.s32.totalorder %s16, 1
      %s180 = scalar_select %p179, %s16, 1
      %s181 = smul.addr %s180, 8
      %s182 = scalar_lea.vmem %s0, %s181
      %p183 = pneg %p37
      %p184 = pneg %p34
      %p185 = scmp.lt.s32.totalorder %s16, 1
      %s186 = scalar_select %p185, %s16, 1
      %s187 = smul.addr %s186, 8
      %s188 = scalar_lea.vmem %s1, %s187
      %p189 = pneg %p63
      %p190 = pneg %p60
      %p191 = pneg %p84
      %p192 = pneg %p81
      %p193 = pneg %p110
      %p194 = pneg %p107
      %p195 = scmp.lt.s32.totalorder %s16, 1
      %s196 = scalar_select %p195, %s16, 1
      %s197 = smul.addr %s196, 8
      %s198 = scalar_lea.vmem %s3, %s197
      %p199 = pneg %p136
      %p200 = pneg %p133
      %p201 = scmp.lt.s32.totalorder %s16, 1
      %s202 = scalar_select %p201, %s16, 1
      %s203 = smul.addr %s202, 8
      %s204 = scalar_lea.vmem %s4, %s203
      %p205 = scmp.lt.s32.totalorder %s16, 1
      %s206 = scalar_select %p205, %s16, 1
      %s207 = smul.addr %s206, 8
      %s208 = scalar_lea.vmem %s0, %s207
      %p209 = scmp.lt.s32.totalorder %s16, 1
      %s210 = scalar_select %p209, %s16, 1
      %s211 = smul.addr %s210, 8
      %s212 = scalar_lea.vmem %s1, %s211
      %p213 = scmp.lt.s32.totalorder %s16, 1
      %s214 = scalar_select %p213, %s16, 1
      %s215 = smul.addr %s214, 8
      %s216 = scalar_lea.vmem %s3, %s215
      %p217 = scmp.lt.s32.totalorder %s16, 1
      %s218 = scalar_select %p217, %s16, 1
      %s219 = smul.addr %s218, 8
      %s220 = scalar_lea.vmem %s4, %s219
      %v221 = vld [vmem:[%s2] sm:$0xff]
      %v222 = vld [vmem:[%s2 + $0x8] sm:$0xff]
      %v223 = vld [vmem:[%s2 + $0x10] sm:$0xff]
      %v224 = vld [vmem:[%s2 + $0x18] sm:$0xff]
      %v225 = vld [vmem:[%s208] sm:$0xff]
      %vm226 = vcmask 261120
      %v228 = vsel %vm226, %v225, 0
      %230 = vmatprep.subr.mxu0 0.0
      %231 = vmatpush1.msra.mxu0 0.0
      %232 = vmatprep.subr.mxu0 0.0
      %233 = vmatpush1.msra.mxu0 0.0
      %234 = vmatprep.subr.mxu0 0.0
      %235 = vmatpush1.msra.mxu0 0.0
      %236 = vmatprep.subr.mxu0 0.0
      %237 = vmatpush1.msra.mxu0 0.0
      %238 = vmatprep.subr.mxu0 0.0
      %239 = vmatpush1.msra.mxu0 0.0
      %240 = vmatprep.subr.mxu0 0.0
      %241 = vmatpush1.msra.mxu0 0.0
      %242 = vmatprep.subr.mxu0 0.0
      %243 = vmatpush1.msra.mxu0 0.0
      %244 = vmatprep.subr.mxu0 0.0
      %245 = vmatpush1.msra.mxu0 0.0
      %246 = vmatprep.subr.mxu0 0.0
      %247 = vmatpush1.msra.mxu0 0.0
      %248 = vmatprep.subr.mxu0 0.0
      %249 = vmatpush1.msra.mxu0 0.0
      %250 = vmatprep.subr.mxu0 0.0
      %251 = vmatpush1.msra.mxu0 0.0
      %252 = vmatprep.subr.mxu0 0.0
      %253 = vmatpush1.msra.mxu0 0.0
      %254 = vmatprep.subr.mxu0 0.0
      %255 = vmatpush1.msra.mxu0 %v224
      %256 = vmatprep.subr.mxu0 0.0
      %257 = vmatpush1.msra.mxu0 %v223
      %258 = vmatprep.subr.mxu0 0.0
      %259 = vmatpush1.msra.mxu0 %v222
      %260 = vmatprep.subr.mxu0 0.0
      %261 = vmatpush1.msra.mxu0 %v221
      %262 = vmatprep.subr.mxu0 0.0
      %263 = vmatpush2.msra.mxu0 0.0
      %264 = vmatprep.subr.mxu0 0.0
      %265 = vmatpush2.msra.mxu0 0.0
      %266 = vmatprep.subr.mxu0 0.0
      %267 = vmatpush2.msra.mxu0 0.0
      %268 = vmatprep.subr.mxu0 0.0
      %269 = vmatpush2.msra.mxu0 0.0
      %270 = vmatprep.subr.mxu0 0.0
      %271 = vmatpush2.msra.mxu0 0.0
      %272 = vmatprep.subr.mxu0 0.0
      %273 = vmatpush2.msra.mxu0 0.0
      %274 = vmatprep.subr.mxu0 0.0
      %275 = vmatpush2.msra.mxu0 0.0
      %276 = vmatprep.subr.mxu0 0.0
      %277 = vmatpush2.msra.mxu0 0.0
      %278 = vmatprep.subr.mxu0 0.0
      %279 = vmatpush2.msra.mxu0 0.0
      %280 = vmatprep.subr.mxu0 0.0
      %281 = vmatpush2.msra.mxu0 0.0
      %282 = vmatprep.subr.mxu0 0.0
      %283 = vmatpush2.msra.mxu0 0.0
      %284 = vmatprep.subr.mxu0 0.0
      %285 = vmatpush2.msra.mxu0 0.0
      %286 = vmatprep.subr.mxu0 0.0
      %287 = vmatpush2.msra.mxu0 0.0
      %288 = vmatprep.subr.mxu0 0.0
      %289 = vmatpush2.msra.mxu0 0.0
      %290 = vmatprep.subr.mxu0 0.0
      %291 = vmatpush2.msra.mxu0 0.0
      %292 = vmatprep.subr.mxu0 0.0
      %293 = vmatpush2.msra.mxu0 0.0
      %294 = vmatprep.mubr.f32.mxu0 0.0
      %295 = vmatmul.mubr.f32.gmra.mxu0 %v228
      %v296 = vpop.f32.mrf.mxu0
      %v297 = vadd.f32 0.0, %v296
      %v298 = vpop.f32.mrf.mxu0
      %299 = vdwg.mxu0
      %vm300 = vcmask 15360
      %301 = vst.msk [vmem:[%s216] sm:$0xff] %vm300, %v297
      %v302 = vld [vmem:[%s212] sm:$0xff]
      %v304 = vsel %vm226, %v302, 0
      %306 = vmatprep.subr.mxu0 0.0
      %307 = vmatpush1.msra.mxu0 0.0
      %308 = vmatprep.subr.mxu0 0.0
      %309 = vmatpush1.msra.mxu0 0.0
      %310 = vmatprep.subr.mxu0 0.0
      %311 = vmatpush1.msra.mxu0 0.0
      %312 = vmatprep.subr.mxu0 0.0
      %313 = vmatpush1.msra.mxu0 0.0
      %314 = vmatprep.subr.mxu0 0.0
      %315 = vmatpush1.msra.mxu0 0.0
      %316 = vmatprep.subr.mxu0 0.0
      %317 = vmatpush1.msra.mxu0 0.0
      %318 = vmatprep.subr.mxu0 0.0
      %319 = vmatpush1.msra.mxu0 0.0
      %320 = vmatprep.subr.mxu0 0.0
      %321 = vmatpush1.msra.mxu0 0.0
      %322 = vmatprep.subr.mxu0 0.0
      %323 = vmatpush1.msra.mxu0 0.0
      %324 = vmatprep.subr.mxu0 0.0
      %325 = vmatpush1.msra.mxu0 0.0
      %326 = vmatprep.subr.mxu0 0.0
      %327 = vmatpush1.msra.mxu0 0.0
      %328 = vmatprep.subr.mxu0 0.0
      %329 = vmatpush1.msra.mxu0 0.0
      %330 = vmatprep.subr.mxu0 0.0
      %331 = vmatpush1.msra.mxu0 %v224
      %332 = vmatprep.subr.mxu0 0.0
      %333 = vmatpush1.msra.mxu0 %v223
      %334 = vmatprep.subr.mxu0 0.0
      %335 = vmatpush1.msra.mxu0 %v222
      %336 = vmatprep.subr.mxu0 0.0
      %337 = vmatpush1.msra.mxu0 %v221
      %338 = vmatprep.subr.mxu0 0.0
      %339 = vmatpush2.msra.mxu0 0.0
      %340 = vmatprep.subr.mxu0 0.0
      %341 = vmatpush2.msra.mxu0 0.0
      %342 = vmatprep.subr.mxu0 0.0
      %343 = vmatpush2.msra.mxu0 0.0
      %344 = vmatprep.subr.mxu0 0.0
      %345 = vmatpush2.msra.mxu0 0.0
      %346 = vmatprep.subr.mxu0 0.0
      %347 = vmatpush2.msra.mxu0 0.0
      %348 = vmatprep.subr.mxu0 0.0
      %349 = vmatpush2.msra.mxu0 0.0
      %350 = vmatprep.subr.mxu0 0.0
      %351 = vmatpush2.msra.mxu0 0.0
      %352 = vmatprep.subr.mxu0 0.0
      %353 = vmatpush2.msra.mxu0 0.0
      %354 = vmatprep.subr.mxu0 0.0
      %355 = vmatpush2.msra.mxu0 0.0
      %356 = vmatprep.subr.mxu0 0.0
      %357 = vmatpush2.msra.mxu0 0.0
      %358 = vmatprep.subr.mxu0 0.0
      %359 = vmatpush2.msra.mxu0 0.0
      %360 = vmatprep.subr.mxu0 0.0
      %361 = vmatpush2.msra.mxu0 0.0
      %362 = vmatprep.subr.mxu0 0.0
      %363 = vmatpush2.msra.mxu0 0.0
      %364 = vmatprep.subr.mxu0 0.0
      %365 = vmatpush2.msra.mxu0 0.0
      %366 = vmatprep.subr.mxu0 0.0
      %367 = vmatpush2.msra.mxu0 0.0
      %368 = vmatprep.subr.mxu0 0.0
      %369 = vmatpush2.msra.mxu0 0.0
      %370 = vmatprep.mubr.f32.mxu0 0.0
      %371 = vmatmul.mubr.f32.gmra.mxu0 %v304
      %v372 = vpop.f32.mrf.mxu0
      %v373 = vadd.f32 0.0, %v372
      %v374 = vpop.f32.mrf.mxu0
      %375 = vdwg.mxu0
      %376 = vst.msk [vmem:[%s220] sm:$0xff] %vm300, %v373
      %p377 = scmp.lt.s32.totalorder %s16, 1
      %s378 = scalar_select %p377, %s16, 1
      %s379 = smul.addr %s378, 8
      %s380 = scalar_lea.vmem %s3, %s379
      %p381 = scmp.lt.s32.totalorder %s16, 1
      %s382 = scalar_select %p381, %s16, 1
      %s383 = smul.addr %s382, 8
      %s384 = scalar_lea.vmem %s4, %s383
      // Predicated region
      $region33: #{diclass_forward.2} parent=31 // pred_check
        %p385 = pneg %p107
      $region34: #{diclass_forward.2} parent=31 // pred_check_branch
        %387 = sbr.rel (%p385) target = $region36
      $region35: #{diclass_forward.2} parent=31 // pred_region
        _
      $region36: #{diclass_forward.2} parent=31 // pred_fallthru
        _
      // Predicated region
      $region37: #{diclass_forward.2} parent=31 // pred_check
        %p388 = pneg %p133
      $region38: #{diclass_forward.2} parent=31 // pred_check_branch
        %390 = sbr.rel (%p388) target = $region40
      $region39: #{diclass_forward.2} parent=31 // pred_region
        _
      $region40: #{diclass_forward.2} parent=31 // pred_fallthru
        _
    $region32: #{diclass_forward.2} parent=5 // pred_fallthru
      _
    %p391 = scmp.le.s32.totalorder 2, %s11
    // Predicated region
    $region41: #{diclass_forward.2} parent=5 // pred_check
      %p392 = pneg %p391
    $region42: #{diclass_forward.2} parent=5 // pred_check_branch
      %394 = sbr.rel (%p392) target = $region44
    $region43: #{diclass_forward.2} parent=5 // pred_region
      %s395 = ssub.s32 %s11, 2
      // Predicated region
      $region45: #{diclass_forward.2} parent=43 // pred_check
        %p396 = pneg %p113
      $region46: #{diclass_forward.2} parent=43 // pred_check_branch
        %398 = sbr.rel (%p396) target = $region48
      $region47: #{diclass_forward.2} parent=43 // pred_region
        %p399 = scmp.lt.s32.totalorder %s17, 1
        %s400 = scalar_select %p399, %s17, 1
        %s401 = smul.addr %s400, 8
        %s402 = scalar_lea.vmem %s3, %s401
      $region48: #{diclass_forward.2} parent=43 // pred_fallthru
        _
      // Predicated region
      $region49: #{diclass_forward.2} parent=43 // pred_check
        %p403 = pneg %p139
      $region50: #{diclass_forward.2} parent=43 // pred_check_branch
        %405 = sbr.rel (%p403) target = $region52
      $region51: #{diclass_forward.2} parent=43 // pred_region
        %p406 = scmp.lt.s32.totalorder %s17, 1
        %s407 = scalar_select %p406, %s17, 1
        %s408 = smul.addr %s407, 8
        %s409 = scalar_lea.vmem %s4, %s408
      $region52: #{diclass_forward.2} parent=43 // pred_fallthru
        _
    $region44: #{diclass_forward.2} parent=5 // pred_fallthru
      _
  $region6: #{diclass_forward.2} parent=0 // loop_footer
    %s15 = sadd.s32 1, %s11
  $region7: #{diclass_forward.2} parent=0 // loop_footer_branch
    %10 = sbr.rel target = $region3
  $region8: #{diclass_forward.2} parent=0 // loop_exit
    _

// kernel: diclass_forward.3
$region0: #{diclass_forward.3}
  #allocation0 [shape = 'u32[]', space=smem, size = 0x4, offset = 0x4, fixed_abs, tag = 'smem constant byte address 0x4 - core index']
  #allocation1 [shape = 'u32[144,128]{1,0:T(1,128)}', space=vmem, size = 0x12000, scoped, tag = 'internal scratch']
  %s0 = inlined_call_operand.vmem [shape: f32[2,1,8], index: 0, kind: input, shape index: {}]
  %s1 = inlined_call_operand.vmem [shape: f32[2,1,8], index: 1, kind: input, shape index: {}]
  %s2 = inlined_call_operand.vmem [shape: f32[1,2,8], index: 2, kind: input, shape index: {}]
  %s3 = inlined_call_operand.vmem [shape: f32[1,2,8], index: 3, kind: input, shape index: {}]
  %s4 = inlined_call_operand.hbm [shape: f32[2,2,8], index: 4, kind: output, shape index: {0}]
  %s5 = inlined_call_operand.hbm [shape: f32[2,2,8], index: 5, kind: output, shape index: {1}]
  %6 = xla_tuple %s4, %s5
  %s7 = sld [smem:[#allocation0]]
  $region34: #{diclass_forward.3} parent=0
    _
  %s9 = ssub.s32 1, %s7
  %s10 = scalar_select 0, %s9, %s7
  $region1: #{diclass_forward.3} parent=0
    #allocation2 [shape = 'u8[2048]{0}', space=vmem, size = 0x800, scoped, tag = 'output window, operand 0, single buffered']
    #allocation3 [shape = 's32[1]{0}', space=sflag, size = 0x4, scoped, tag = 'scoped memory for diclass_forward.3']
    #allocation4 [shape = 'u8[2048]{0}', space=vmem, size = 0x800, scoped, tag = 'output window, operand 1, single buffered']
    #allocation5 [shape = 's32[1]{0}', space=sflag, size = 0x4, scoped, tag = 'scoped memory for diclass_forward.3']
    %11 = vsyncpa [#allocation3], 0
    %12 = vsyncpa [#allocation5], 0
    // Predicated region
    $region2: #{diclass_forward.3} parent=1 // pred_check
      _
    $region3: #{diclass_forward.3} parent=1 // pred_check_branch
      %14 = sbr.rel (0) target = $region5
    $region4: #{diclass_forward.3} parent=1 // pred_region
      _
    $region5: #{diclass_forward.3} parent=1 // pred_fallthru
      _
    // Predicated region
    $region6: #{diclass_forward.3} parent=1 // pred_check
      _
    $region7: #{diclass_forward.3} parent=1 // pred_check_branch
      %16 = sbr.rel (0) target = $region9
    $region8: #{diclass_forward.3} parent=1 // pred_region
      _
    $region9: #{diclass_forward.3} parent=1 // pred_fallthru
      _
    // Predicated region
    $region10: #{diclass_forward.3} parent=1 // pred_check
      _
    $region11: #{diclass_forward.3} parent=1 // pred_check_branch
      %18 = sbr.rel (0) target = $region13
    $region12: #{diclass_forward.3} parent=1 // pred_region
      _
    $region13: #{diclass_forward.3} parent=1 // pred_fallthru
      _
    // Predicated region
    $region14: #{diclass_forward.3} parent=1 // pred_check
      _
    $region15: #{diclass_forward.3} parent=1 // pred_check_branch
      %20 = sbr.rel (0) target = $region17
    $region16: #{diclass_forward.3} parent=1 // pred_region
      _
    $region17: #{diclass_forward.3} parent=1 // pred_fallthru
      _
    %v21 = vld [vmem:[%s0] sm:$0x1]
    %v22 = vld [vmem:[%s0 + $0x1] sm:$0x1]
    %v23 = vld [vmem:[%s2] sm:$0x3]
    %v26 = vlaneseq
    %v27 = vshrl.u32 %v26, 7
    %v28 = vsub.s32 0, %v27
    %v29 = vrot.slane %v21, %v28
    %v30 = vlaneseq
    %v31 = vshrl.u32 %v30, 7
    %v32 = vsub.s32 0, %v31
    %v33 = vrot.slane %v22, %v32
    %v36 = vadd.f32 %v29, %v23
    %v37 = vadd.f32 %v33, %v23
    %vm38 = vcmask 58368
    %39 = vst.msk [vmem:[#allocation2] sm:$0x3] %vm38, %v36
    %40 = vst.msk [vmem:[#allocation2 + $0x2] sm:$0x3] %vm38, %v37
    %v41 = vld [vmem:[%s1] sm:$0x1]
    %v42 = vld [vmem:[%s1 + $0x1] sm:$0x1]
    %v43 = vld [vmem:[%s3] sm:$0x3]
    %v46 = vlaneseq
    %v47 = vshrl.u32 %v46, 7
    %v48 = vsub.s32 0, %v47
    %v49 = vrot.slane %v41, %v48
    %v50 = vlaneseq
    %v51 = vshrl.u32 %v50, 7
    %v52 = vsub.s32 0, %v51
    %v53 = vrot.slane %v42, %v52
    %v56 = vadd.f32 %v49, %v43
    %v57 = vadd.f32 %v53, %v43
    %58 = vst.msk [vmem:[#allocation4] sm:$0x3] %vm38, %v56
    %59 = vst.msk [vmem:[#allocation4 + $0x2] sm:$0x3] %vm38, %v57
    // Predicated region
    $region18: #{diclass_forward.3} parent=1 // pred_check
      _
    $region19: #{diclass_forward.3} parent=1 // pred_check_branch
      %61 = sbr.rel (0) target = $region21
    $region20: #{diclass_forward.3} parent=1 // pred_region
      %s63 = ssub.s32 64, 64
      %64 = vsyncadd [#allocation3], %s63
      %s65 = sshll.u32 [#allocation2], 4
      %s66 = int_to_ptr.vmem [resolvable:$true] %s65
      %71 = dma.vmem_to_hbm [thread:$0]  %s66, 64, %s4, [#allocation3], 32, 32, 2
    $region21: #{diclass_forward.3} parent=1 // pred_fallthru
      _
    // Predicated region
    $region22: #{diclass_forward.3} parent=1 // pred_check
      _
    $region23: #{diclass_forward.3} parent=1 // pred_check_branch
      %73 = sbr.rel (0) target = $region25
    $region24: #{diclass_forward.3} parent=1 // pred_region
      %s75 = ssub.s32 64, 64
      %76 = vsyncadd [#allocation5], %s75
      %s77 = sshll.u32 [#allocation4], 4
      %s78 = int_to_ptr.vmem [resolvable:$true] %s77
      %83 = dma.vmem_to_hbm [thread:$0]  %s78, 64, %s5, [#allocation5], 32, 32, 2
    $region25: #{diclass_forward.3} parent=1 // pred_fallthru
      _
    // Predicated region
    $region26: #{diclass_forward.3} parent=1 // pred_check
      _
    $region27: #{diclass_forward.3} parent=1 // pred_check_branch
      %85 = sbr.rel (0) target = $region29
    $region28: #{diclass_forward.3} parent=1 // pred_region
      %86 = dma.done [#allocation3], 64
    $region29: #{diclass_forward.3} parent=1 // pred_fallthru
      _
    // Predicated region
    $region30: #{diclass_forward.3} parent=1 // pred_check
      _
    $region31: #{diclass_forward.3} parent=1 // pred_check_branch
      %88 = sbr.rel (0) target = $region33
    $region32: #{diclass_forward.3} parent=1 // pred_region
      %89 = dma.done [#allocation5], 64
    $region33: #{diclass_forward.3} parent=1 // pred_fallthru
      _
    %90 = vsyncpa [#allocation3], 1
    %91 = vsyncpa [#allocation5], 1

</llo_original>
